<compile_context>
chip_gen: v6e
topology: v6e:2x2x1
jax: 0.10.0
libtpu: 0.0.40
codegen_flags: <defaults>
</compile_context>

<pallas_src>
import math

import jax
import jax.numpy as jnp
from jax.experimental import pallas as pl
from jax.experimental.pallas import tpu as pltpu


_VMEM_LIMIT = 64 * 1024 * 1024   # valid on v5e/v6e/v7x


def _layernorm(v, w, b, eps=1e-5):
    # PyTorch LayerNorm semantics: biased variance, eps inside rsqrt, fp32 math
    # (the LayerNorm subclass casts to fp32 -- we keep LN math fp32 throughout).
    mu = jnp.mean(v, axis=-1, keepdims=True)
    var = jnp.mean((v - mu) ** 2, axis=-1, keepdims=True)
    return (v - mu) * jax.lax.rsqrt(var + eps) * w + b


# ---------------------------------------------------------------------------
# Kernel 1: LN1 + fused QKV projection (row-tiled)
# ---------------------------------------------------------------------------
def _qkv_kernel(x_ref, w_ref, b_ref, ln_ref, o_ref):
    x = x_ref[0]                                        # (Tr, D) fp32
    ln = ln_ref[...]                                    # (2, D)  [ln1_w, ln1_b]
    xn = _layernorm(x, ln[0], ln[1]).astype(w_ref.dtype)
    qkv = jnp.dot(xn, w_ref[...], preferred_element_type=jnp.float32) + b_ref[...]
    o_ref[0] = qkv.astype(o_ref.dtype)


# ---------------------------------------------------------------------------
# Kernel 2: flash attention (online softmax, KV tiles accumulated in scratch)
# ---------------------------------------------------------------------------
def _flash_kernel(q_ref, k_ref, v_ref, o_ref, m_sc, l_sc, acc_sc):
    ki = pl.program_id(3)

    @pl.when(ki == 0)
    def _():
        m_sc[...] = jnp.full(m_sc.shape, -jnp.inf, jnp.float32)
        l_sc[...] = jnp.zeros(l_sc.shape, jnp.float32)
        acc_sc[...] = jnp.zeros(acc_sc.shape, jnp.float32)

    q = q_ref[0, 0]                                     # (Tq, dh)  already * 1/sqrt(dh)
    k = k_ref[0, 0]                                     # (Tk, dh)
    v = v_ref[0, 0]                                     # (Tk, dh)

    s = jax.lax.dot_general(q, k, (((1,), (1,)), ((), ())),
                            preferred_element_type=jnp.float32)   # (Tq, Tk) fp32

    m_prev = m_sc[...]
    m_new = jnp.maximum(m_prev, jnp.max(s, axis=-1, keepdims=True))
    alpha = jnp.exp(m_prev - m_new)
    p = jnp.exp(s - m_new)
    l_sc[...] = alpha * l_sc[...] + jnp.sum(p, axis=-1, keepdims=True)
    acc_sc[...] = alpha * acc_sc[...] + jnp.dot(
        p.astype(v.dtype), v, preferred_element_type=jnp.float32)
    m_sc[...] = m_new

    @pl.when(ki == pl.num_programs(3) - 1)
    def _():
        inv_l = pl.reciprocal(l_sc[...], approx=True)   # EUP slot
        o_ref[0, 0] = (acc_sc[...] * inv_l).astype(o_ref.dtype)


# ---------------------------------------------------------------------------
# Kernel 3: out-proj + LN12 + residual, then MLP + LN22 + residual (row-tiled)
# ---------------------------------------------------------------------------
def _out_mlp_kernel(x_ref, a_ref, wo_ref, w1_ref, b1_ref, w2_ref, ln_ref, o_ref):
    x = x_ref[0]                                        # (Tr, D) fp32
    lnp = ln_ref[...]                                   # (8, D): ln12_w/b, ln2_w/b, ln22_w/b, bo, b2

    a = jnp.dot(a_ref[0], wo_ref[...], preferred_element_type=jnp.float32) + lnp[6]
    x1 = x + _layernorm(a, lnp[0], lnp[1])

    z = _layernorm(x1, lnp[2], lnp[3]).astype(w1_ref.dtype)
    h = jnp.dot(z, w1_ref[...], preferred_element_type=jnp.float32) + b1_ref[...]
    h = jnp.maximum(h, 0.0).astype(w2_ref.dtype)        # ReLU (dropout = identity in eval)
    m = jnp.dot(h, w2_ref[...], preferred_element_type=jnp.float32) + lnp[7]
    o_ref[0] = x1 + _layernorm(m, lnp[4], lnp[5])


# ---------------------------------------------------------------------------
# Wrapper
# ---------------------------------------------------------------------------
def residual_attention_block(x, params, n_head, *, compute_dtype=jnp.bfloat16,
                             row_tile=256, q_tile=256, kv_tile=256):
    """x: (B, S, D) fp32. params: dict of weights (projection weights pre-transposed)."""
    B, S, D = x.shape
    dh = D // n_head
    assert n_head * dh == D
    Tr = min(row_tile, S)
    Tq = min(q_tile, S)
    Tk = min(kv_tile, S)
    # S must be a multiple of the tile sizes (pad in the caller for ragged sequences).
    assert S % Tr == 0 and S % Tq == 0 and S % Tk == 0

    x = x.astype(jnp.float32)
    scale = 1.0 / math.sqrt(dh)

    # --- one-time weight prep: fold 1/sqrt(dh) into Q columns, cast GEMM weights to
    #     compute_dtype (bf16), pack the tiny LN/bias vectors into slabs. ---
    wqkv = params["wqkv_t"].astype(jnp.float32)                       # (D, 3D)
    bqkv = params["bqkv"].astype(jnp.float32)                         # (1, 3D)
    wqkv = jnp.concatenate([wqkv[:, :D] * scale, wqkv[:, D:]], axis=1)
    bqkv = jnp.concatenate([bqkv[:, :D] * scale, bqkv[:, D:]], axis=1)
    wqkv_c = wqkv.astype(compute_dtype)
    wo_c = params["wo_t"].astype(compute_dtype)                       # (D, D)
    w1_c = params["w1_t"].astype(compute_dtype)                       # (D, 4D)
    w2_c = params["w2_t"].astype(compute_dtype)                       # (4D, D)
    b1 = params["b1"].astype(jnp.float32)                             # (1, 4D)

    ln1_pack = jnp.stack([params["ln1_w"][0], params["ln1_b"][0]]).astype(jnp.float32)
    lnc_pack = jnp.stack([
        params["ln12_w"][0], params["ln12_b"][0],
        params["ln2_w"][0],  params["ln2_b"][0],
        params["ln22_w"][0], params["ln22_b"][0],
        params["bo"][0],     params["b2"][0],
    ]).astype(jnp.float32)                                            # (8, D)

    cp2 = pltpu.CompilerParams(dimension_semantics=("parallel", "parallel"),
                               vmem_limit_bytes=_VMEM_LIMIT)

    # ---- K1: LN1 + fused QKV projection --------------------------------
    # (weights use constant block indices; they stay resident across the grid)
    qkv = pl.pallas_call(
        _qkv_kernel,
        out_shape=jax.ShapeDtypeStruct((B, S, 3 * D), compute_dtype),
        grid_spec=pltpu.PrefetchScalarGridSpec(
            num_scalar_prefetch=0,
            grid=(B, S // Tr),
            in_specs=[
                pl.BlockSpec((1, Tr, D), lambda b, r: (b, r, 0)),
                pl.BlockSpec((D, 3 * D), lambda b, r: (0, 0)),
                pl.BlockSpec((1, 3 * D), lambda b, r: (0, 0)),
                pl.BlockSpec((2, D), lambda b, r: (0, 0)),
            ],
            out_specs=pl.BlockSpec((1, Tr, 3 * D), lambda b, r: (b, r, 0)),
        ),
        compiler_params=cp2,
    )(x, wqkv_c, bqkv, ln1_pack)

    # split heads outside the kernel (layout plumbing): (B,S,3D) -> 3 x (B,H,S,dh)
    qkv = qkv.reshape(B, S, 3, n_head, dh)
    q = jnp.transpose(qkv[:, :, 0], (0, 2, 1, 3))
    k = jnp.transpose(qkv[:, :, 1], (0, 2, 1, 3))
    v = jnp.transpose(qkv[:, :, 2], (0, 2, 1, 3))

    # ---- K2: flash attention -------------------------------------------
    attn = pl.pallas_call(
        _flash_kernel,
        out_shape=jax.ShapeDtypeStruct((B, n_head, S, dh), compute_dtype),
        grid_spec=pltpu.PrefetchScalarGridSpec(
            num_scalar_prefetch=0,
            grid=(B, n_head, S // Tq, S // Tk),
            in_specs=[
                pl.BlockSpec((1, 1, Tq, dh), lambda b, h, qi, ki: (b, h, qi, 0)),
                pl.BlockSpec((1, 1, Tk, dh), lambda b, h, qi, ki: (b, h, ki, 0)),
                pl.BlockSpec((1, 1, Tk, dh), lambda b, h, qi, ki: (b, h, ki, 0)),
            ],
            out_specs=pl.BlockSpec((1, 1, Tq, dh), lambda b, h, qi, ki: (b, h, qi, 0)),
            scratch_shapes=[
                pltpu.VMEM((Tq, 1), jnp.float32),    # running max
                pltpu.VMEM((Tq, 1), jnp.float32),    # running denom
                pltpu.VMEM((Tq, dh), jnp.float32),   # output accumulator
            ],
        ),
        compiler_params=pltpu.CompilerParams(
            dimension_semantics=("parallel", "parallel", "parallel", "arbitrary"),
            vmem_limit_bytes=_VMEM_LIMIT),
    )(q, k, v)

    # concatenate heads (layout plumbing outside the kernel)
    attn = jnp.transpose(attn, (0, 2, 1, 3)).reshape(B, S, D)

    # ---- K3: out-proj + LN12 + residual + MLP + LN22 + residual ---------
    out = pl.pallas_call(
        _out_mlp_kernel,
        out_shape=jax.ShapeDtypeStruct((B, S, D), jnp.float32),
        grid_spec=pltpu.PrefetchScalarGridSpec(
            num_scalar_prefetch=0,
            grid=(B, S // Tr),
            in_specs=[
                pl.BlockSpec((1, Tr, D), lambda b, r: (b, r, 0)),   # x
                pl.BlockSpec((1, Tr, D), lambda b, r: (b, r, 0)),   # attn (pre out-proj)
                pl.BlockSpec((D, D), lambda b, r: (0, 0)),          # wo
                pl.BlockSpec((D, 4 * D), lambda b, r: (0, 0)),      # w1
                pl.BlockSpec((1, 4 * D), lambda b, r: (0, 0)),      # b1
                pl.BlockSpec((4 * D, D), lambda b, r: (0, 0)),      # w2
                pl.BlockSpec((8, D), lambda b, r: (0, 0)),          # packed LN params + bo + b2
            ],
            out_specs=pl.BlockSpec((1, Tr, D), lambda b, r: (b, r, 0)),
        ),
        compiler_params=cp2,
    )(x, attn, wo_c, w1_c, b1, w2_c, lnc_pack)

    return out


# ---------------------------------------------------------------------------
# pure-JAX fp32 reference (PyTorch semantics) for correctness check
# ---------------------------------------------------------------------------
def reference(x, params, n_head):
    B, S, D = x.shape
    dh = D // n_head

    def ln(v, w, b):
        mu = jnp.mean(v, axis=-1, keepdims=True)
        var = jnp.mean((v - mu) ** 2, axis=-1, keepdims=True)
        return (v - mu) / jnp.sqrt(var + 1e-5) * w[0] + b[0]

    xn = ln(x, params["ln1_w"], params["ln1_b"])
    qkv = xn @ params["wqkv_t"] + params["bqkv"][0]
    q, k, v = jnp.split(qkv, 3, axis=-1)
    q = q.reshape(B, S, n_head, dh).transpose(0, 2, 1, 3)
    k = k.reshape(B, S, n_head, dh).transpose(0, 2, 1, 3)
    v = v.reshape(B, S, n_head, dh).transpose(0, 2, 1, 3)
    s = jnp.einsum("bhqd,bhkd->bhqk", q, k) / math.sqrt(dh)
    p = jax.nn.softmax(s, axis=-1)
    a = jnp.einsum("bhqk,bhkd->bhqd", p, v).transpose(0, 2, 1, 3).reshape(B, S, D)
    a = a @ params["wo_t"] + params["bo"][0]
    x1 = x + ln(a, params["ln12_w"], params["ln12_b"])
    z = ln(x1, params["ln2_w"], params["ln2_b"])
    h = jnp.maximum(z @ params["w1_t"] + params["b1"][0], 0.0)
    m = h @ params["w2_t"] + params["b2"][0]
    return x1 + ln(m, params["ln22_w"], params["ln22_b"])


if __name__ == "__main__":
    B, S, D, H = 2, 8, 32, 4

    key = jax.random.PRNGKey(0)
    ks = jax.random.split(key, 12)

    def rnd(k, shape, scale=0.05):
        return (scale * jax.random.normal(k, shape)).astype(jnp.float32)

    params = {
        # nn.MultiheadAttention in_proj_weight (3D, D) -> transposed (D, 3D)
        "wqkv_t": rnd(ks[0], (D, 3 * D)),
        "bqkv":   rnd(ks[1], (1, 3 * D)),
        # out_proj Linear(D, D) -> transposed (D, D)
        "wo_t":   rnd(ks[2], (D, D)),
        "bo":     rnd(ks[3], (1, D)),
        # LayerNorms: default init
        "ln1_w":  jnp.ones((1, D), jnp.float32), "ln1_b":  jnp.zeros((1, D), jnp.float32),
        "ln12_w": jnp.ones((1, D), jnp.float32), "ln12_b": jnp.zeros((1, D), jnp.float32),
        "ln2_w":  jnp.ones((1, D), jnp.float32), "ln2_b":  jnp.zeros((1, D), jnp.float32),
        "ln22_w": jnp.ones((1, D), jnp.float32), "ln22_b": jnp.zeros((1, D), jnp.float32),
        # MLP c_fc Linear(D, 4D) -> transposed (D, 4D)
        "w1_t":   rnd(ks[4], (D, 4 * D)),
        "b1":     rnd(ks[5], (1, 4 * D)),
        # MLP c_proj Linear(4D, D) -> transposed (4D, D)
        "w2_t":   rnd(ks[6], (4 * D, D)),
        "b2":     rnd(ks[7], (1, D)),
    }

    x = jax.random.normal(ks[8], (B, S, D), dtype=jnp.float32)

    ref = reference(x, params, H)

    # fp32 MXU path: checks kernel semantics closely
    out_f32 = jax.block_until_ready(
        residual_attention_block(x, params, H, compute_dtype=jnp.float32))
    assert out_f32.shape == (B, S, D)
    assert jnp.allclose(out_f32, ref, atol=1e-2, rtol=1e-2), "fp32 path mismatch"

    # bf16 MXU path (production config from the perf review): relaxed tolerance
    out_bf16 = jax.block_until_ready(
        residual_attention_block(x, params, H, compute_dtype=jnp.bfloat16))
    assert out_bf16.shape == (B, S, D)
    assert jnp.allclose(out_bf16, ref, atol=5e-2, rtol=5e-2), "bf16 path mismatch"

    print("KERNEL_OK")
</pallas_src>

<mosaic_0001>
module attributes {stable_mosaic.version = 11 : i64} {
  func.func @_qkv_kernel(%arg0: i32, %arg1: i32, %arg2: memref<1x8x32xf32, #tpu.memory_space<vmem>>, %arg3: memref<32x96xf32, #tpu.memory_space<vmem>>, %arg4: memref<1x96xf32, #tpu.memory_space<vmem>>, %arg5: memref<2x32xf32, #tpu.memory_space<vmem>>, %arg6: memref<1x8x96xf32, #tpu.memory_space<vmem>>) attributes {dimension_semantics = [#tpu.dimension_semantics<parallel>, #tpu.dimension_semantics<parallel>], iteration_bounds = array<i64: 2, 1>, scalar_prefetch = 0 : i64, scratch_operands = 0 : i64, tpu.core_type = #tpu.core_type<tc>, window_params = [{transform_indices = @transform_0, window_bounds = array<i64: 1, 8, 32>}, {pipeline_mode = #tpu.pipeline_mode<synchronous>, transform_indices = @transform_1, window_bounds = array<i64: 32, 96>}, {pipeline_mode = #tpu.pipeline_mode<synchronous>, transform_indices = @transform_2, window_bounds = array<i64: 1, 96>}, {pipeline_mode = #tpu.pipeline_mode<synchronous>, transform_indices = @transform_3, window_bounds = array<i64: 2, 32>}, {transform_indices = @transform_4, window_bounds = array<i64: 1, 8, 96>}]} {
    %c0 = arith.constant 0 : index
    %c0_0 = arith.constant 0 : index
    %c0_1 = arith.constant 0 : index
    %0 = vector.load %arg2[%c0, %c0_0, %c0_1] : memref<1x8x32xf32, #tpu.memory_space<vmem>>, vector<1x8x32xf32>
    %1 = vector.shape_cast %0 : vector<1x8x32xf32> to vector<8x32xf32>
    %c0_2 = arith.constant 0 : index
    %c0_3 = arith.constant 0 : index
    %2 = vector.load %arg5[%c0_2, %c0_3] : memref<2x32xf32, #tpu.memory_space<vmem>>, vector<2x32xf32>
    %3 = vector.extract_strided_slice %2 {offsets = [0, 0], sizes = [1, 32], strides = [1, 1]} : vector<2x32xf32> to vector<1x32xf32>
    %4 = vector.shape_cast %3 : vector<1x32xf32> to vector<32xf32>
    %5 = vector.extract_strided_slice %2 {offsets = [1, 0], sizes = [1, 32], strides = [1, 1]} : vector<2x32xf32> to vector<1x32xf32>
    %6 = vector.shape_cast %5 : vector<1x32xf32> to vector<32xf32>
    %cst = arith.constant dense<0.000000e+00> : vector<8xf32>
    %7 = vector.multi_reduction <add>, %1, %cst [1] : vector<8x32xf32> to vector<8xf32>
    %8 = vector.shape_cast %7 : vector<8xf32> to vector<8x1xf32>
    %cst_4 = arith.constant 3.200000e+01 : f32
    %9 = vector.broadcast %cst_4 : f32 to vector<8x1xf32>
    %10 = arith.divf %8, %9 : vector<8x1xf32>
    %11 = vector.broadcast %10 : vector<8x1xf32> to vector<8x32xf32>
    %12 = arith.subf %1, %11 : vector<8x32xf32>
    %13 = arith.mulf %12, %12 : vector<8x32xf32>
    %cst_5 = arith.constant dense<0.000000e+00> : vector<8xf32>
    %14 = vector.multi_reduction <add>, %13, %cst_5 [1] : vector<8x32xf32> to vector<8xf32>
    %15 = vector.shape_cast %14 : vector<8xf32> to vector<8x1xf32>
    %cst_6 = arith.constant 3.200000e+01 : f32
    %16 = vector.broadcast %cst_6 : f32 to vector<8x1xf32>
    %17 = arith.divf %15, %16 : vector<8x1xf32>
    %18 = vector.broadcast %10 : vector<8x1xf32> to vector<8x32xf32>
    %19 = arith.subf %1, %18 : vector<8x32xf32>
    %cst_7 = arith.constant 9.99999974E-6 : f32
    %20 = vector.broadcast %cst_7 : f32 to vector<8x1xf32>
    %21 = arith.addf %17, %20 : vector<8x1xf32>
    %22 = math.rsqrt %21 : vector<8x1xf32>
    %23 = vector.broadcast %22 : vector<8x1xf32> to vector<8x32xf32>
    %24 = arith.mulf %19, %23 : vector<8x32xf32>
    %25 = vector.shape_cast %4 : vector<32xf32> to vector<1x32xf32>
    %26 = vector.broadcast %25 : vector<1x32xf32> to vector<8x32xf32>
    %27 = arith.mulf %24, %26 : vector<8x32xf32>
    %28 = vector.shape_cast %6 : vector<32xf32> to vector<1x32xf32>
    %29 = vector.broadcast %28 : vector<1x32xf32> to vector<8x32xf32>
    %30 = arith.addf %27, %29 : vector<8x32xf32>
    %c0_8 = arith.constant 0 : index
    %c0_9 = arith.constant 0 : index
    %31 = vector.load %arg3[%c0_8, %c0_9] : memref<32x96xf32, #tpu.memory_space<vmem>>, vector<32x96xf32>
    %cst_10 = arith.constant dense<0.000000e+00> : vector<8x96xf32>
    %32 = tpu.matmul %30, %31, %cst_10 {dimension_numbers = #tpu.dot_dimension_numbers<[1], [0], [0], [1], [0, 0, 1, 1], [], []>} : vector<8x32xf32>, vector<32x96xf32>, vector<8x96xf32> -> vector<8x96xf32>
    %c0_11 = arith.constant 0 : index
    %c0_12 = arith.constant 0 : index
    %33 = vector.load %arg4[%c0_11, %c0_12] : memref<1x96xf32, #tpu.memory_space<vmem>>, vector<1x96xf32>
    %34 = vector.broadcast %33 : vector<1x96xf32> to vector<8x96xf32>
    %35 = arith.addf %32, %34 : vector<8x96xf32>
    %c0_13 = arith.constant 0 : index
    %c0_14 = arith.constant 0 : index
    %c0_15 = arith.constant 0 : index
    %36 = vector.load %arg6[%c0_13, %c0_14, %c0_15] : memref<1x8x96xf32, #tpu.memory_space<vmem>>, vector<1x8x96xf32>
    %37 = vector.shape_cast %36 : vector<1x8x96xf32> to vector<8x96xf32>
    %38 = vector.shape_cast %35 : vector<8x96xf32> to vector<1x8x96xf32>
    tpu.vector_store %arg6[%c0_13, %c0_14, %c0_15], %38 {strides = array<i32>} : memref<1x8x96xf32, #tpu.memory_space<vmem>>, vector<1x8x96xf32>,
    return
  }
  func.func @transform_0(%arg0: i32, %arg1: i32) -> (i32, i32, i32) {
    %c0_i32 = arith.constant 0 : i32
    %c0_i32_0 = arith.constant 0 : i32
    return %arg0, %arg1, %c0_i32 : i32, i32, i32
  }
  func.func @transform_1(%arg0: i32, %arg1: i32) -> (i32, i32) {
    %c0_i32 = arith.constant 0 : i32
    %c0_i32_0 = arith.constant 0 : i32
    %c0_i32_1 = arith.constant 0 : i32
    return %c0_i32, %c0_i32_0 : i32, i32
  }
  func.func @transform_2(%arg0: i32, %arg1: i32) -> (i32, i32) {
    %c0_i32 = arith.constant 0 : i32
    %c0_i32_0 = arith.constant 0 : i32
    %c0_i32_1 = arith.constant 0 : i32
    return %c0_i32, %c0_i32_0 : i32, i32
  }
  func.func @transform_3(%arg0: i32, %arg1: i32) -> (i32, i32) {
    %c0_i32 = arith.constant 0 : i32
    %c0_i32_0 = arith.constant 0 : i32
    %c0_i32_1 = arith.constant 0 : i32
    return %c0_i32, %c0_i32_0 : i32, i32
  }
  func.func @transform_4(%arg0: i32, %arg1: i32) -> (i32, i32, i32) {
    %c0_i32 = arith.constant 0 : i32
    %c0_i32_0 = arith.constant 0 : i32
    return %arg0, %arg1, %c0_i32 : i32, i32, i32
  }
}

</mosaic_0001>

<llo_original>
// kernel: tpu_custom_call.1
$region0: #{tpu_custom_call.1}
  #allocation0 [shape = 'u32[]', space=smem, size = 0x4, offset = 0x4, fixed_abs, tag = 'smem constant byte address 0x4 - core index']
  #allocation1 [shape = 'u32[144,128]{1,0:T(1,128)}', space=vmem, size = 0x12000, scoped, tag = 'internal scratch']
  %s0 = inlined_call_operand.hbm [shape: f32[2,8,32], index: 0, kind: input, shape index: {}]
  %s1 = inlined_call_operand.hbm [shape: f32[32,96], index: 1, kind: input, shape index: {}]
  %s2 = inlined_call_operand.vmem [shape: f32[1,96], index: 2, kind: input, shape index: {}]
  %s3 = inlined_call_operand.vmem [shape: f32[2,32], index: 3, kind: input, shape index: {}]
  %s4 = inlined_call_operand.hbm [shape: f32[2,8,96], index: 4, kind: output, shape index: {}]
  %s5 = sld [smem:[#allocation0]]
  $region57: #{tpu_custom_call.1} parent=0
    _
  %s7 = ssub.s32 1, %s5
  %s8 = scalar_select 0, %s7, %s5
  $region1: #{tpu_custom_call.1} parent=0
    #allocation2 [shape = 'u8[8192]{0}', space=vmem, size = 0x2000, scoped, tag = 'input window, operand 0']
    #allocation3 [shape = 's32[2]{0}', space=sflag, size = 0x8, scoped, tag = 'scoped memory for tpu_custom_call.1']
    #allocation4 [shape = 's32[2]{0}', space=sflag, size = 0x8, scoped, tag = 'scoped memory for tpu_custom_call.1']
    #allocation5 [shape = 'u8[16384]{0}', space=vmem, size = 0x4000, scoped, tag = 'input window, operand 1, single buffered']
    #allocation6 [shape = 's32[1]{0}', space=sflag, size = 0x4, scoped, tag = 'scoped memory for tpu_custom_call.1']
    #allocation7 [shape = 'u8[8192]{0}', space=vmem, size = 0x2000, scoped, tag = 'output window, operand 0']
    %9 = vsyncpa [#allocation3], 0
    %s10 = scalar_lea.sflag [#allocation3], 1
    %11 = vsyncpa %s10, 0
    %12 = vsyncpa [#allocation6], 0
    %13 = vsyncpa [#allocation4], 0
    %s14 = scalar_lea.sflag [#allocation4], 1
    %15 = vsyncpa %s14, 0
    loop: start=0, step=1, limit=4
    $region2: #{tpu_custom_call.1} parent=1 // loop_pre_header
      _
    $region3: #{tpu_custom_call.1} parent=1 // loop_header
      %s17 = sphi 0, %s21
      %p18 = scmp.ge.s32.totalorder %s17, 4
      %s24 = sphi 0, %s36
      %s25 = sphi 0, %s32
      %s26 = sphi 0, %s24
      %s27 = sphi 0, %s25
      %s28 = sphi 0, %s26
      %s29 = sphi 0, %s27
      %s41 = sphi 0, %s43
      %s44 = sphi 0, %s41
      %s45 = sphi 0, %s44
      %s61 = sphi 0, %s45
      %s65 = sphi 0, %s65
      %s67 = sphi 0, %s65
      %s68 = sphi 0, %s67
      %s82 = sphi 0, %s68
      %s86 = sphi 0, %s86
      %s88 = sphi 0, %s86
      %s89 = sphi 0, %s88
      %s103 = sphi 0, %s89
      %s107 = sphi 0, %s107
      %s109 = sphi 0, %s107
      %s110 = sphi 0, %s109
      %s124 = sphi 0, %s110
      %s132 = sphi 0, %s134
      %s135 = sphi 0, %s132
      %s136 = sphi 0, %s135
      %s152 = sphi 0, %s136
    $region4: #{tpu_custom_call.1} parent=1 // loop_header_branch
      %20 = sbr.rel (%p18) target = $region8
    $region5: #{tpu_custom_call.1} parent=1 // loop_body
      %s22 = ssub.s32 %s17, 1
      %s23 = ssub.s32 %s17, 2
      %s30 = sadd.s32 1, %s25
      %p31 = scmp.ge.s32.totalorder %s30, 1
      %s32 = scalar_select %p31, 0, %s30
      %s33 = sadd.s32 1, %s24
      %s34 = scalar_select %p31, %s33, %s24
      %p35 = scmp.ge.s32.totalorder %s34, 2
      %s36 = scalar_select %p35, 0, %s34
      %s37 = ssub.s32 %s24, %s36
      %s38 = ssub.s32 %s25, %s32
      %s39 = sor.u32 %s37, %s38
      %p40 = scmp.eq.s32.totalorder %s39, 0
      %s42 = sadd.s32 %s41, 1
      %s43 = scalar_select %p40, %s41, %s42
      %p46 = pneg %p40
      %p47 = scmp.eq.s32.totalorder %s17, 1
      %p48 = por %p46, %p47
      %p49 = scmp.ne.s32.totalorder %s41, %s44
      %p50 = scmp.eq.s32.totalorder %s17, 0
      %p51 = por %p49, %p50
      %p52 = scmp.ne.s32.totalorder %s41, %s44
      %p53 = scmp.eq.s32.totalorder %s22, 1
      %p54 = por %p52, %p53
      %p55 = scmp.ne.s32.totalorder %s44, %s45
      %p56 = scmp.eq.s32.totalorder %s22, 0
      %p57 = por %p55, %p56
      %p58 = scmp.ne.s32.totalorder %s44, %s45
      %p59 = scmp.eq.s32.totalorder %s23, 1
      %p60 = por %p58, %p59
      %p62 = scmp.ne.s32.totalorder %s45, %s61
      %p63 = scmp.eq.s32.totalorder %s23, 0
      %p64 = por %p62, %p63
      %s66 = sadd.s32 %s65, 1
      %p69 = scmp.eq.s32.totalorder %s17, 1
      %p70 = scmp.ne.s32.totalorder %s65, %s67
      %p71 = scmp.eq.s32.totalorder %s17, 0
      %p72 = por %p70, %p71
      %p73 = scmp.ne.s32.totalorder %s65, %s67
      %p74 = scmp.eq.s32.totalorder %s22, 1
      %p75 = por %p73, %p74
      %p76 = scmp.ne.s32.totalorder %s67, %s68
      %p77 = scmp.eq.s32.totalorder %s22, 0
      %p78 = por %p76, %p77
      %p79 = scmp.ne.s32.totalorder %s67, %s68
      %p80 = scmp.eq.s32.totalorder %s23, 1
      %p81 = por %p79, %p80
      %p83 = scmp.ne.s32.totalorder %s68, %s82
      %p84 = scmp.eq.s32.totalorder %s23, 0
      %p85 = por %p83, %p84
      %s87 = sadd.s32 %s86, 1
      %p90 = scmp.eq.s32.totalorder %s17, 1
      %p91 = scmp.ne.s32.totalorder %s86, %s88
      %p92 = scmp.eq.s32.totalorder %s17, 0
      %p93 = por %p91, %p92
      %p94 = scmp.ne.s32.totalorder %s86, %s88
      %p95 = scmp.eq.s32.totalorder %s22, 1
      %p96 = por %p94, %p95
      %p97 = scmp.ne.s32.totalorder %s88, %s89
      %p98 = scmp.eq.s32.totalorder %s22, 0
      %p99 = por %p97, %p98
      %p100 = scmp.ne.s32.totalorder %s88, %s89
      %p101 = scmp.eq.s32.totalorder %s23, 1
      %p102 = por %p100, %p101
      %p104 = scmp.ne.s32.totalorder %s89, %s103
      %p105 = scmp.eq.s32.totalorder %s23, 0
      %p106 = por %p104, %p105
      %s108 = sadd.s32 %s107, 1
      %p111 = scmp.eq.s32.totalorder %s17, 1
      %p112 = scmp.ne.s32.totalorder %s107, %s109
      %p113 = scmp.eq.s32.totalorder %s17, 0
      %p114 = por %p112, %p113
      %p115 = scmp.ne.s32.totalorder %s107, %s109
      %p116 = scmp.eq.s32.totalorder %s22, 1
      %p117 = por %p115, %p116
      %p118 = scmp.ne.s32.totalorder %s109, %s110
      %p119 = scmp.eq.s32.totalorder %s22, 0
      %p120 = por %p118, %p119
      %p121 = scmp.ne.s32.totalorder %s109, %s110
      %p122 = scmp.eq.s32.totalorder %s23, 1
      %p123 = por %p121, %p122
      %p125 = scmp.ne.s32.totalorder %s110, %s124
      %p126 = scmp.eq.s32.totalorder %s23, 0
      %p127 = por %p125, %p126
      %s128 = ssub.s32 %s24, %s36
      %s129 = ssub.s32 %s25, %s32
      %s130 = sor.u32 %s128, %s129
      %p131 = scmp.eq.s32.totalorder %s130, 0
      %s133 = sadd.s32 %s132, 1
      %s134 = scalar_select %p131, %s132, %s133
      %p137 = pneg %p131
      %p138 = scmp.eq.s32.totalorder %s17, 1
      %p139 = por %p137, %p138
      %p140 = scmp.ne.s32.totalorder %s132, %s135
      %p141 = scmp.eq.s32.totalorder %s17, 0
      %p142 = por %p140, %p141
      %p143 = scmp.ne.s32.totalorder %s132, %s135
      %p144 = scmp.eq.s32.totalorder %s22, 1
      %p145 = por %p143, %p144
      %p146 = scmp.ne.s32.totalorder %s135, %s136
      %p147 = scmp.eq.s32.totalorder %s22, 0
      %p148 = por %p146, %p147
      %p149 = scmp.ne.s32.totalorder %s135, %s136
      %p150 = scmp.eq.s32.totalorder %s23, 1
      %p151 = por %p149, %p150
      %p153 = scmp.ne.s32.totalorder %s136, %s152
      %p154 = scmp.eq.s32.totalorder %s23, 0
      %p155 = por %p153, %p154
      %p156 = scmp.le.s32.totalorder 1, %s17
      %p157 = scmp.lt.s32.totalorder %s17, 3
      %p158 = pnand %p156, %p157
      %p159 = pneg %p158
      // Predicated region
      $region9: #{tpu_custom_call.1} parent=5 // pred_check
        _
      $region10: #{tpu_custom_call.1} parent=5 // pred_check_branch
        %161 = sbr.rel (%p158) target = $region12
      $region11: #{tpu_custom_call.1} parent=5 // pred_region
        %s162 = ssub.s32 %s17, 1
        // Predicated region
        $region13: #{tpu_custom_call.1} parent=11 // pred_check
          %p163 = pneg %p78
        $region14: #{tpu_custom_call.1} parent=11 // pred_check_branch
          %165 = sbr.rel (%p163) target = $region16
        $region15: #{tpu_custom_call.1} parent=11 // pred_region
          %s167 = ssub.s32 512, 512
          %168 = vsyncadd [#allocation6], %s167
          %s169 = sshll.u32 [#allocation5], 4
          %s170 = int_to_ptr.vmem [resolvable:$true] %s169
          %175 = dma.hbm_to_vmem [thread:$0]  %s1, 512, %s170, [#allocation6], 128, 128, 8
        $region16: #{tpu_custom_call.1} parent=11 // pred_fallthru
          _
        // Predicated region
        $region17: #{tpu_custom_call.1} parent=11 // pred_check
          %p176 = pneg %p99
        $region18: #{tpu_custom_call.1} parent=11 // pred_check_branch
          %178 = sbr.rel (%p176) target = $region20
        $region19: #{tpu_custom_call.1} parent=11 // pred_region
          _
        $region20: #{tpu_custom_call.1} parent=11 // pred_fallthru
          _
        // Predicated region
        $region21: #{tpu_custom_call.1} parent=11 // pred_check
          %p179 = pneg %p120
        $region22: #{tpu_custom_call.1} parent=11 // pred_check_branch
          %181 = sbr.rel (%p179) target = $region24
        $region23: #{tpu_custom_call.1} parent=11 // pred_region
          _
        $region24: #{tpu_custom_call.1} parent=11 // pred_fallthru
          _
      $region12: #{tpu_custom_call.1} parent=5 // pred_fallthru
        _
      %p182 = scmp.lt.s32.totalorder %s17, 2
      // Predicated region
      $region25: #{tpu_custom_call.1} parent=5 // pred_check
        %p183 = pneg %p182
      $region26: #{tpu_custom_call.1} parent=5 // pred_check_branch
        %185 = sbr.rel (%p183) target = $region28
      $region27: #{tpu_custom_call.1} parent=5 // pred_region
        // Predicated region
        $region29: #{tpu_custom_call.1} parent=27 // pred_check
          %p186 = pneg %p51
        $region30: #{tpu_custom_call.1} parent=27 // pred_check_branch
          %188 = sbr.rel (%p186) target = $region32
        $region31: #{tpu_custom_call.1} parent=27 // pred_region
          %s189 = sand.u32 %s41, 1
          %s190 = scalar_lea.sflag [#allocation3], %s189
          %s191 = sand.u32 %s41, 1
          %s192 = smul.addr %s191, 8
          %s193 = scalar_lea.vmem [#allocation2], %s192
          %s195 = ssub.s32 128, 128
          %196 = vsyncadd %s190, %s195
          %s197 = sadd.s32 %s25, %s24
          %s198 = smul.addr %s197, 128
          %s199 = scalar_lea.hbm %s0, %s198
          %s201 = sshll.u32 %s193, 4
          %s202 = int_to_ptr.vmem [resolvable:$true] %s201
          %204 = dma.hbm_to_vmem [thread:$0]  %s199, 128, %s202, %s190
        $region32: #{tpu_custom_call.1} parent=27 // pred_fallthru
          _
      $region28: #{tpu_custom_call.1} parent=5 // pred_fallthru
        _
      %p205 = scmp.le.s32.totalorder 1, %s17
      %p206 = scmp.lt.s32.totalorder %s17, 3
      %p207 = pnand %p205, %p206
      %p208 = pneg %p207
      // Predicated region
      $region33: #{tpu_custom_call.1} parent=5 // pred_check
        _
      $region34: #{tpu_custom_call.1} parent=5 // pred_check_branch
        %210 = sbr.rel (%p207) target = $region36
      $region35: #{tpu_custom_call.1} parent=5 // pred_region
        %s211 = ssub.s32 %s17, 1
        %s212 = sand.u32 %s44, 1
        %s213 = scalar_lea.sflag [#allocation3], %s212
        %s214 = sand.u32 %s44, 1
        %s215 = smul.addr %s214, 8
        %s216 = scalar_lea.vmem [#allocation2], %s215
        // Predicated region
        $region37: #{tpu_custom_call.1} parent=35 // pred_check
          %p217 = pneg %p57
        $region38: #{tpu_custom_call.1} parent=35 // pred_check_branch
          %219 = sbr.rel (%p217) target = $region40
        $region39: #{tpu_custom_call.1} parent=35 // pred_region
          %220 = dma.done %s213, 128
        $region40: #{tpu_custom_call.1} parent=35 // pred_fallthru
          _
        // Predicated region
        $region41: #{tpu_custom_call.1} parent=35 // pred_check
          %p221 = pneg %p78
        $region42: #{tpu_custom_call.1} parent=35 // pred_check_branch
          %223 = sbr.rel (%p221) target = $region44
        $region43: #{tpu_custom_call.1} parent=35 // pred_region
          %224 = dma.done [#allocation6], 512
        $region44: #{tpu_custom_call.1} parent=35 // pred_fallthru
          _
        %s225 = sand.u32 %s44, 1
        %s226 = scalar_lea.sflag [#allocation3], %s225
        %s227 = sand.u32 %s44, 1
        %s228 = smul.addr %s227, 8
        %s229 = scalar_lea.vmem [#allocation2], %s228
        %p230 = pneg %p57
        %p231 = pneg %p54
        %p232 = pneg %p78
        %p233 = pneg %p75
        %p234 = pneg %p99
        %p235 = pneg %p96
        %p236 = pneg %p120
        %p237 = pneg %p117
        %p238 = pneg %p148
        %p239 = pneg %p145
        %s240 = sand.u32 %s135, 1
        %s241 = scalar_lea.sflag [#allocation4], %s240
        %s242 = sand.u32 %s135, 1
        %s243 = smul.addr %s242, 8
        %s244 = scalar_lea.vmem [#allocation7], %s243
        %v245 = vld [vmem:[%s216] sm:$0xff]
        %v246 = vld [vmem:[%s3] sm:$0x3]
        %vm247 = vcmask 261120
        %v248 = vsel %vm247, %v245, 0.0
        %249 = vadd.xlane.f32.xlu0 %v248
        %v250 = vpop.xlane.xlu0 %249
        %v251 = vrcp.pop 32.0
        %v252 = vmul.f32 %v250, %v251
        %v253 = vsub.f32 %v245, %v252
        %v254 = vmul.f32 %v253, %v253
        %v255 = vsel %vm247, %v254, 0.0
        %256 = vadd.xlane.f32.xlu0 %v255
        %v257 = vpop.xlane.xlu0 %256
        %v258 = vmul.f32 %v257, %v251
        %v259 = vadd.f32 %v258, 1e-05
        %v260 = vrsqrt.pop %v259
        %v261 = vmul.f32 %v253, %v260
        %v262 = vlaneseq
        %v263 = vshrl.u32 %v262, 7
        %v264 = vsub.s32 0, %v263
        %v265 = vrot.slane %v246, %v264
        %v266 = vmul.f32 %v261, %v265
        %v267 = vlaneseq
        %v268 = vshrl.u32 %v267, 7
        %v269 = vsub.s32 1, %v268
        %v270 = vrot.slane %v246, %v269
        %v271 = vadd.f32 %v266, %v270
        %v272 = vld [vmem:[#allocation5] sm:$0xff]
        %v273 = vld [vmem:[#allocation5 + $0x8] sm:$0xff]
        %v274 = vld [vmem:[#allocation5 + $0x10] sm:$0xff]
        %v275 = vld [vmem:[#allocation5 + $0x18] sm:$0xff]
        %v276 = vld [vmem:[%s2] sm:$0x1]
        %v278 = vlaneseq
        %v279 = vshrl.u32 %v278, 7
        %v280 = vsub.s32 0, %v279
        %v281 = vrot.slane %v276, %v280
        %v284 = vsel %vm247, %v271, 0
        %286 = vmatprep.subr.mxu0 0.0
        %287 = vmatpush1.msra.mxu0 0.0
        %288 = vmatprep.subr.mxu0 0.0
        %289 = vmatpush1.msra.mxu0 0.0
        %290 = vmatprep.subr.mxu0 0.0
        %291 = vmatpush1.msra.mxu0 0.0
        %292 = vmatprep.subr.mxu0 0.0
        %293 = vmatpush1.msra.mxu0 0.0
        %294 = vmatprep.subr.mxu0 0.0
        %295 = vmatpush1.msra.mxu0 0.0
        %296 = vmatprep.subr.mxu0 0.0
        %297 = vmatpush1.msra.mxu0 0.0
        %298 = vmatprep.subr.mxu0 0.0
        %299 = vmatpush1.msra.mxu0 0.0
        %300 = vmatprep.subr.mxu0 0.0
        %301 = vmatpush1.msra.mxu0 0.0
        %302 = vmatprep.subr.mxu0 0.0
        %303 = vmatpush1.msra.mxu0 0.0
        %304 = vmatprep.subr.mxu0 0.0
        %305 = vmatpush1.msra.mxu0 0.0
        %306 = vmatprep.subr.mxu0 0.0
        %307 = vmatpush1.msra.mxu0 0.0
        %308 = vmatprep.subr.mxu0 0.0
        %309 = vmatpush1.msra.mxu0 0.0
        %310 = vmatprep.subr.mxu0 0.0
        %311 = vmatpush1.msra.mxu0 %v275
        %312 = vmatprep.subr.mxu0 0.0
        %313 = vmatpush1.msra.mxu0 %v274
        %314 = vmatprep.subr.mxu0 0.0
        %315 = vmatpush1.msra.mxu0 %v273
        %316 = vmatprep.subr.mxu0 0.0
        %317 = vmatpush1.msra.mxu0 %v272
        %318 = vmatprep.subr.mxu0 0.0
        %319 = vmatpush2.msra.mxu0 0.0
        %320 = vmatprep.subr.mxu0 0.0
        %321 = vmatpush2.msra.mxu0 0.0
        %322 = vmatprep.subr.mxu0 0.0
        %323 = vmatpush2.msra.mxu0 0.0
        %324 = vmatprep.subr.mxu0 0.0
        %325 = vmatpush2.msra.mxu0 0.0
        %326 = vmatprep.subr.mxu0 0.0
        %327 = vmatpush2.msra.mxu0 0.0
        %328 = vmatprep.subr.mxu0 0.0
        %329 = vmatpush2.msra.mxu0 0.0
        %330 = vmatprep.subr.mxu0 0.0
        %331 = vmatpush2.msra.mxu0 0.0
        %332 = vmatprep.subr.mxu0 0.0
        %333 = vmatpush2.msra.mxu0 0.0
        %334 = vmatprep.subr.mxu0 0.0
        %335 = vmatpush2.msra.mxu0 0.0
        %336 = vmatprep.subr.mxu0 0.0
        %337 = vmatpush2.msra.mxu0 0.0
        %338 = vmatprep.subr.mxu0 0.0
        %339 = vmatpush2.msra.mxu0 0.0
        %340 = vmatprep.subr.mxu0 0.0
        %341 = vmatpush2.msra.mxu0 0.0
        %342 = vmatprep.subr.mxu0 0.0
        %343 = vmatpush2.msra.mxu0 0.0
        %344 = vmatprep.subr.mxu0 0.0
        %345 = vmatpush2.msra.mxu0 0.0
        %346 = vmatprep.subr.mxu0 0.0
        %347 = vmatpush2.msra.mxu0 0.0
        %348 = vmatprep.subr.mxu0 0.0
        %349 = vmatpush2.msra.mxu0 0.0
        %350 = vmatprep.mubr.f32.mxu0 0.0
        %351 = vmatmul.mubr.f32.gmra.mxu0 %v284
        %v352 = vpop.f32.mrf.mxu0
        %v353 = vadd.f32 %v281, %v352
        %v354 = vpop.f32.mrf.mxu0
        %355 = vdwg.mxu0
        %vm356 = vcmask 785408
        %357 = vst.msk [vmem:[%s244] sm:$0xff] %vm356, %v353
        %s358 = sand.u32 %s135, 1
        %s359 = scalar_lea.sflag [#allocation4], %s358
        %s360 = sand.u32 %s135, 1
        %s361 = smul.addr %s360, 8
        %s362 = scalar_lea.vmem [#allocation7], %s361
        // Predicated region
        $region45: #{tpu_custom_call.1} parent=35 // pred_check
          %p363 = pneg %p145
        $region46: #{tpu_custom_call.1} parent=35 // pred_check_branch
          %365 = sbr.rel (%p363) target = $region48
        $region47: #{tpu_custom_call.1} parent=35 // pred_region
          %s367 = ssub.s32 128, 128
          %368 = vsyncadd %s359, %s367
          %s369 = sadd.s32 %s27, %s26
          %s370 = smul.addr %s369, 128
          %s371 = scalar_lea.hbm %s4, %s370
          %s373 = sshll.u32 %s362, 4
          %s374 = int_to_ptr.vmem [resolvable:$true] %s373
          %376 = dma.vmem_to_hbm [thread:$0]  %s374, 128, %s371, %s359
        $region48: #{tpu_custom_call.1} parent=35 // pred_fallthru
          _
      $region36: #{tpu_custom_call.1} parent=5 // pred_fallthru
        _
      %p377 = scmp.le.s32.totalorder 2, %s17
      // Predicated region
      $region49: #{tpu_custom_call.1} parent=5 // pred_check
        %p378 = pneg %p377
      $region50: #{tpu_custom_call.1} parent=5 // pred_check_branch
        %380 = sbr.rel (%p378) target = $region52
      $region51: #{tpu_custom_call.1} parent=5 // pred_region
        %s381 = ssub.s32 %s17, 2
        // Predicated region
        $region53: #{tpu_custom_call.1} parent=51 // pred_check
          %p382 = pneg %p151
        $region54: #{tpu_custom_call.1} parent=51 // pred_check_branch
          %384 = sbr.rel (%p382) target = $region56
        $region55: #{tpu_custom_call.1} parent=51 // pred_region
          %s385 = sand.u32 %s136, 1
          %s386 = scalar_lea.sflag [#allocation4], %s385
          %s387 = sand.u32 %s136, 1
          %s388 = smul.addr %s387, 8
          %s389 = scalar_lea.vmem [#allocation7], %s388
          %390 = dma.done %s386, 128
        $region56: #{tpu_custom_call.1} parent=51 // pred_fallthru
          _
      $region52: #{tpu_custom_call.1} parent=5 // pred_fallthru
        _
    $region6: #{tpu_custom_call.1} parent=1 // loop_footer
      %s21 = sadd.s32 1, %s17
    $region7: #{tpu_custom_call.1} parent=1 // loop_footer_branch
      %16 = sbr.rel target = $region3
    $region8: #{tpu_custom_call.1} parent=1 // loop_exit
      _
    %391 = vsyncpa [#allocation3], 1
    %s392 = scalar_lea.sflag [#allocation3], 1
    %393 = vsyncpa %s392, 1
    %394 = vsyncpa [#allocation6], 1
    %395 = vsyncpa [#allocation4], 1
    %s396 = scalar_lea.sflag [#allocation4], 1
    %397 = vsyncpa %s396, 1

</llo_original>
